<compile_context>
chip_gen: v6e
topology: v6e:2x2x1
jax: 0.10.0
libtpu: 0.0.40
codegen_flags: <defaults>
</compile_context>

<pallas_src>
import functools

import jax
import jax.numpy as jnp
from jax.experimental import pallas as pl
from jax.experimental.pallas import tpu as pltpu


# ----------------------------- Pallas kernel -------------------------------

def _fused_cnn_kernel(xp_ref, wband_ref, bconv_ref, pool_ref, wpoolfc_ref,
                      bfc_ref, o_ref, acc_ref, *, H, K, B):
    """Conv3x3 + bias + ReLU + global-avg-pool + Linear for B images.

    xp_ref     : [B, Hp, Kpad]      zero-padded images, lanes = Wp*C padded to 128
    wband_ref  : [K*Kpad, W*F]      banded conv weights, taps folded into rows
    bconv_ref  : [1, W*F]           conv bias tiled across W
    pool_ref   : [B, B*H]           block-diagonal ones (sum over H per image)
    wpoolfc_ref: [W*F, ClsPad]      (mean over W*H  o  FC) folded weight
    bfc_ref    : [1, ClsPad]
    o_ref      : [B, ClsPad]        lane-dense logits for this block of images
    acc_ref    : [B*H, W*F] f32     VMEM scratch accumulator
    """
    kpad = xp_ref.shape[-1]                       # 128 (lane-padded Wp*C)

    # Fold the K vertical taps into lanes: K shifted row-windows per image,
    # lane-concatenated -> one wide [B*H, K*Kpad] LHS for a single MXU push.
    taps = [xp_ref[:, pl.ds(dh, H), :] for dh in range(K)]   # K x [B, H, Kpad]
    lhs = jnp.concatenate(taps, axis=-1).reshape(B * H, K * kpad)

    # Conv as one matmul, accumulated straight into the VMEM scratch.
    acc_ref[...] = jnp.dot(lhs, wband_ref[...],
                           preferred_element_type=jnp.float32)     # [B*H, W*F]

    hidden = jnp.maximum(acc_ref[...] + bconv_ref[...], 0.0)       # bias + ReLU

    # Global average pool + FC, all on the MXU:
    #   block-diag ones sums over H per image (M = B), then the pre-folded
    #   [W*F, ClsPad] weight applies (mean over W, 1/(H*W), FC) in one go.
    pooled = jnp.dot(pool_ref[...], hidden,
                     preferred_element_type=jnp.float32)            # [B, W*F]
    logits = jnp.dot(pooled, wpoolfc_ref[...],
                     preferred_element_type=jnp.float32) + bfc_ref[...]
    o_ref[...] = logits.astype(o_ref.dtype)


# ------------------------- one-time weight packing --------------------------

def _pack_weights(w_conv, b_conv, w_fc, b_fc, *, H, W, k, kpad, cls_pad):
    """Banded conv weight + folded pool/FC weight (hoisted out of forward)."""
    F, C, _, _ = w_conv.shape
    Cls = w_fc.shape[0]
    pad = k // 2
    Wp = W + 2 * pad

    # banded conv weight: wband[dh, p*C+c, w*F+f] = w_conv[f,c,dh,p-w]
    w_taps = jnp.transpose(w_conv, (2, 3, 1, 0))                 # [K, K, C, F]
    p_idx = jnp.arange(Wp)[:, None]
    w_idx = jnp.arange(W)[None, :]
    dw = p_idx - w_idx                                           # [Wp, W]
    valid = (dw >= 0) & (dw < k)
    band = w_taps[:, jnp.clip(dw, 0, k - 1), :, :]               # [K,Wp,W,C,F]
    band = band * valid[None, :, :, None, None].astype(w_taps.dtype)
    w_band = jnp.transpose(band, (0, 1, 3, 2, 4)).reshape(k, Wp * C, W * F)
    # pad contraction lanes to 128 per tap, then merge the taps into rows
    w_band = jnp.pad(w_band, ((0, 0), (0, kpad - Wp * C), (0, 0)))
    w_band = w_band.reshape(k * kpad, W * F)                     # [K*Kpad, W*F]

    b_tiled = jnp.tile(b_conv, W).reshape(1, W * F)              # bias per lane
    # (global average pool over W) o (FC), with the 1/(H*W) mean folded in;
    # output classes padded to a lane-dense 128.
    w_poolfc = jnp.tile(w_fc.T, (W, 1)) / float(H * W)           # [W*F, Cls]
    w_poolfc = jnp.pad(w_poolfc, ((0, 0), (0, cls_pad - Cls)))
    b_fc_row = jnp.pad(b_fc, (0, cls_pad - Cls)).reshape(1, cls_pad)
    return w_band, b_tiled, w_poolfc, b_fc_row


# --------------------------- jitted forward pass ---------------------------

@functools.partial(jax.jit, static_argnames=("B", "k", "kpad", "cls_pad"))
def swag_cnn_forward(x_nchw, w_band, b_conv_row, w_poolfc, b_fc_row,
                     *, B, k, kpad, cls_pad):
    N, C, H, W = x_nchw.shape
    pad = k // 2
    Hp, Wp = H + 2 * pad, W + 2 * pad
    WF = w_band.shape[-1]                                        # W*F

    Nb = -(-N // B)                                              # grid blocks
    Npad = Nb * B

    # ---- input layout prep (fused under jit; no 9x im2col in HBM) ---------
    x = jnp.transpose(x_nchw, (0, 2, 3, 1))                      # NCHW -> NHWC
    xp = jnp.pad(x, ((0, Npad - N), (pad, pad), (pad, pad), (0, 0)))
    xp2d = xp.reshape(Npad, Hp, Wp * C)                          # lanes = Wp*C
    xp2d = jnp.pad(xp2d, ((0, 0), (0, 0), (0, kpad - Wp * C)))   # lane-pad 128
    xp4d = xp2d.reshape(Nb, B, Hp, kpad)
    # TODO(synk): the zero-pad halo + lane padding could be handled fully
    # in-kernel with masking to avoid this small materialized padded copy.

    # block-diagonal ones pooling matrix (constant-folded at compile time)
    row_ids = jnp.arange(B)[:, None]
    col_ids = jnp.arange(B * H)[None, :]
    pool_ones = (col_ids // H == row_ids).astype(jnp.float32)    # [B, B*H]

    kernel = functools.partial(_fused_cnn_kernel, H=H, K=k, B=B)
    out = pl.pallas_call(
        kernel,
        out_shape=jax.ShapeDtypeStruct((Nb, B, cls_pad), jnp.float32),
        grid=(Nb,),
        in_specs=[
            # B padded images per grid step (double-buffered by Pallas)
            pl.BlockSpec((None, B, Hp, kpad), lambda n: (n, 0, 0, 0)),
            # small weights: full blocks, constant index maps -> stay resident
            pl.BlockSpec((k * kpad, WF), lambda n: (0, 0)),
            pl.BlockSpec((1, WF), lambda n: (0, 0)),
            pl.BlockSpec((B, B * H), lambda n: (0, 0)),
            pl.BlockSpec((WF, cls_pad), lambda n: (0, 0)),
            pl.BlockSpec((1, cls_pad), lambda n: (0, 0)),
        ],
        out_specs=pl.BlockSpec((None, B, cls_pad), lambda n: (n, 0, 0)),
        scratch_shapes=[pltpu.VMEM((B * H, WF), jnp.float32)],
        compiler_params=pltpu.CompilerParams(
            dimension_semantics=("parallel",)),    # shard batch blocks across TCs
    )(xp4d, w_band, b_conv_row, pool_ones, w_poolfc, b_fc_row)
    return out.reshape(Npad, cls_pad)[:N]          # classes sliced by caller


# ------------------------------ SWAG wrapper -------------------------------

class SWAGPallas:
    """SWAG(base) where base = Conv3x3 -> ReLU -> GlobalAvgPool -> Linear.

    Parameters are initialized deterministically in-script (as if produced by
    SWAG.sample()); SWAG bookkeeping buffers (n_models, *_mean, *_sq_mean) are
    kept but do not affect the forward path, matching the PyTorch semantics.
    """

    def __init__(self, key, in_ch=4, feat=8, num_classes=10, k=3):
        k0, k1, k2, k3 = jax.random.split(key, 4)
        # PyTorch Conv2d weight layout: [F, C, KH, KW]
        self.w_conv = 0.1 * jax.random.normal(k0, (feat, in_ch, k, k), jnp.float32)
        self.b_conv = 0.1 * jax.random.normal(k1, (feat,), jnp.float32)
        # PyTorch Linear weight layout: [out, in]
        self.w_fc = 0.1 * jax.random.normal(k2, (num_classes, feat), jnp.float32)
        self.b_fc = 0.1 * jax.random.normal(k3, (num_classes,), jnp.float32)
        self.k = k
        self.num_classes = num_classes
        self._pack_cache = {}          # (H, W) -> (packed weights, kpad, cls_pad)
        # SWAG bookkeeping buffers (unused in forward, kept for fidelity)
        self.n_models = jnp.zeros((1,), jnp.float32)
        self.buffers = {
            "weight_mean": jnp.zeros_like(self.w_conv),
            "weight_sq_mean": jnp.zeros_like(self.w_conv),
            "fc_weight_mean": jnp.zeros_like(self.w_fc),
            "fc_weight_sq_mean": jnp.zeros_like(self.w_fc),
        }
        # TODO(synk): SWAG.sample()/collect_model()/export_numpy_params() are
        # training-time weight-statistics updates, not part of the forward hot
        # path; not kernelized.

    def _packed(self, H, W):
        key = (H, W)
        if key not in self._pack_cache:
            pad = self.k // 2
            Wp = W + 2 * pad
            C = self.w_conv.shape[1]
            kpad = ((Wp * C + 127) // 128) * 128
            cls_pad = ((self.num_classes + 127) // 128) * 128
            packed = _pack_weights(self.w_conv, self.b_conv, self.w_fc, self.b_fc,
                                   H=H, W=W, k=self.k, kpad=kpad, cls_pad=cls_pad)
            self._pack_cache[key] = (packed, kpad, cls_pad)
        return self._pack_cache[key]

    def __call__(self, x_nchw):
        N, _, H, W = x_nchw.shape
        # B images per grid step: fill the MXU row dim (up to M = 16*H = 256)
        # while keeping >= 2 grid blocks for N >= 2 so both v7x TCs are used.
        B = min(16, max(1, -(-N // 2)))
        packed, kpad, cls_pad = self._packed(H, W)
        out = swag_cnn_forward(x_nchw, *packed, B=B, k=self.k,
                               kpad=kpad, cls_pad=cls_pad)
        return out[:, :self.num_classes]


# --------------------------------- main ------------------------------------

def _reference(model, x_nchw):
    """Pure-JAX reference of the same forward (for a sanity check)."""
    y = jax.lax.conv_general_dilated(
        x_nchw, model.w_conv, window_strides=(1, 1), padding="SAME",
        dimension_numbers=("NCHW", "OIHW", "NCHW"))
    y = y + model.b_conv[None, :, None, None]
    y = jnp.maximum(y, 0.0)
    pooled = jnp.mean(y, axis=(2, 3))                            # [N, F]
    return pooled @ model.w_fc.T + model.b_fc


if __name__ == "__main__":
    key = jax.random.PRNGKey(0)
    k_param, k_x = jax.random.split(key)

    model = SWAGPallas(k_param, in_ch=4, feat=8, num_classes=10, k=3)
    x = jax.random.normal(k_x, (2, 4, 16, 16), jnp.float32)      # NCHW like PyTorch

    out = jax.block_until_ready(model(x))

    ref = _reference(model, x)
    assert out.shape == (2, 10)
    assert jnp.allclose(out, ref, atol=2e-4, rtol=2e-4), "mismatch vs JAX reference"

    print("KERNEL_OK")
</pallas_src>

<mosaic_0001>
module attributes {stable_mosaic.version = 11 : i64} {
  func.func @_fused_cnn_kernel(%arg0: i32, %arg1: memref<1x1x18x128xf32, #tpu.memory_space<vmem>>, %arg2: memref<384x128xf32, #tpu.memory_space<vmem>>, %arg3: memref<1x128xf32, #tpu.memory_space<vmem>>, %arg4: memref<1x16xf32, #tpu.memory_space<vmem>>, %arg5: memref<128x128xf32, #tpu.memory_space<vmem>>, %arg6: memref<1x128xf32, #tpu.memory_space<vmem>>, %arg7: memref<1x1x128xf32, #tpu.memory_space<vmem>>, %arg8: memref<16x128xf32, #tpu.memory_space<vmem>>) attributes {dimension_semantics = [#tpu.dimension_semantics<parallel>], iteration_bounds = array<i64: 2>, scalar_prefetch = 0 : i64, scratch_operands = 1 : i64, tpu.core_type = #tpu.core_type<tc>, window_params = [{transform_indices = @transform_0, window_bounds = array<i64: 1, 1, 18, 128>}, {pipeline_mode = #tpu.pipeline_mode<synchronous>, transform_indices = @transform_1, window_bounds = array<i64: 384, 128>}, {pipeline_mode = #tpu.pipeline_mode<synchronous>, transform_indices = @transform_2, window_bounds = array<i64: 1, 128>}, {pipeline_mode = #tpu.pipeline_mode<synchronous>, transform_indices = @transform_3, window_bounds = array<i64: 1, 16>}, {pipeline_mode = #tpu.pipeline_mode<synchronous>, transform_indices = @transform_4, window_bounds = array<i64: 128, 128>}, {pipeline_mode = #tpu.pipeline_mode<synchronous>, transform_indices = @transform_5, window_bounds = array<i64: 1, 128>}, {transform_indices = @transform_6, window_bounds = array<i64: 1, 1, 128>}]} {
    %c0 = arith.constant 0 : index
    %c0_0 = arith.constant 0 : index
    %c0_1 = arith.constant 0 : index
    %c0_2 = arith.constant 0 : index
    %0 = vector.load %arg1[%c0, %c0_0, %c0_1, %c0_2] : memref<1x1x18x128xf32, #tpu.memory_space<vmem>>, vector<1x1x16x128xf32>
    %1 = vector.shape_cast %0 : vector<1x1x16x128xf32> to vector<1x16x128xf32>
    %c0_3 = arith.constant 0 : index
    %c0_4 = arith.constant 0 : index
    %c1 = arith.constant 1 : index
    %c0_5 = arith.constant 0 : index
    %2 = vector.load %arg1[%c0_3, %c0_4, %c1, %c0_5] : memref<1x1x18x128xf32, #tpu.memory_space<vmem>>, vector<1x1x16x128xf32>
    %3 = vector.shape_cast %2 : vector<1x1x16x128xf32> to vector<1x16x128xf32>
    %c0_6 = arith.constant 0 : index
    %c0_7 = arith.constant 0 : index
    %c2 = arith.constant 2 : index
    %c0_8 = arith.constant 0 : index
    %4 = vector.load %arg1[%c0_6, %c0_7, %c2, %c0_8] : memref<1x1x18x128xf32, #tpu.memory_space<vmem>>, vector<1x1x16x128xf32>
    %5 = vector.shape_cast %4 : vector<1x1x16x128xf32> to vector<1x16x128xf32>
    %6 = tpu.concatenate %1, %3, %5 in 2 : vector<1x16x128xf32>, vector<1x16x128xf32>, vector<1x16x128xf32> -> vector<1x16x384xf32>
    %7 = vector.shape_cast %6 : vector<1x16x384xf32> to vector<16x384xf32>
    %c0_9 = arith.constant 0 : index
    %c0_10 = arith.constant 0 : index
    %8 = vector.load %arg2[%c0_9, %c0_10] : memref<384x128xf32, #tpu.memory_space<vmem>>, vector<384x128xf32>
    %cst = arith.constant dense<0.000000e+00> : vector<16x128xf32>
    %9 = tpu.matmul %7, %8, %cst {dimension_numbers = #tpu.dot_dimension_numbers<[1], [0], [0], [1], [0, 0, 1, 1], [], []>} : vector<16x384xf32>, vector<384x128xf32>, vector<16x128xf32> -> vector<16x128xf32>
    %c0_11 = arith.constant 0 : index
    %c0_12 = arith.constant 0 : index
    %10 = vector.load %arg8[%c0_11, %c0_12] : memref<16x128xf32, #tpu.memory_space<vmem>>, vector<16x128xf32>
    tpu.vector_store %arg8[%c0_11, %c0_12], %9 {strides = array<i32>} : memref<16x128xf32, #tpu.memory_space<vmem>>, vector<16x128xf32>,
    %c0_13 = arith.constant 0 : index
    %c0_14 = arith.constant 0 : index
    %11 = vector.load %arg8[%c0_13, %c0_14] : memref<16x128xf32, #tpu.memory_space<vmem>>, vector<16x128xf32>
    %c0_15 = arith.constant 0 : index
    %c0_16 = arith.constant 0 : index
    %12 = vector.load %arg3[%c0_15, %c0_16] : memref<1x128xf32, #tpu.memory_space<vmem>>, vector<1x128xf32>
    %13 = vector.broadcast %12 : vector<1x128xf32> to vector<16x128xf32>
    %14 = arith.addf %11, %13 : vector<16x128xf32>
    %cst_17 = arith.constant 0.000000e+00 : f32
    %15 = vector.broadcast %cst_17 : f32 to vector<16x128xf32>
    %16 = arith.maximumf %14, %15 : vector<16x128xf32>
    %c0_18 = arith.constant 0 : index
    %c0_19 = arith.constant 0 : index
    %17 = vector.load %arg4[%c0_18, %c0_19] : memref<1x16xf32, #tpu.memory_space<vmem>>, vector<1x16xf32>
    %cst_20 = arith.constant dense<0.000000e+00> : vector<1x128xf32>
    %18 = tpu.matmul %17, %16, %cst_20 {dimension_numbers = #tpu.dot_dimension_numbers<[1], [0], [0], [1], [0, 0, 1, 1], [], []>} : vector<1x16xf32>, vector<16x128xf32>, vector<1x128xf32> -> vector<1x128xf32>
    %c0_21 = arith.constant 0 : index
    %c0_22 = arith.constant 0 : index
    %19 = vector.load %arg5[%c0_21, %c0_22] : memref<128x128xf32, #tpu.memory_space<vmem>>, vector<128x128xf32>
    %cst_23 = arith.constant dense<0.000000e+00> : vector<1x128xf32>
    %20 = tpu.matmul %18, %19, %cst_23 {dimension_numbers = #tpu.dot_dimension_numbers<[1], [0], [0], [1], [0, 0, 1, 1], [], []>} : vector<1x128xf32>, vector<128x128xf32>, vector<1x128xf32> -> vector<1x128xf32>
    %c0_24 = arith.constant 0 : index
    %c0_25 = arith.constant 0 : index
    %21 = vector.load %arg6[%c0_24, %c0_25] : memref<1x128xf32, #tpu.memory_space<vmem>>, vector<1x128xf32>
    %22 = arith.addf %20, %21 : vector<1x128xf32>
    %c0_26 = arith.constant 0 : index
    %c0_27 = arith.constant 0 : index
    %c0_28 = arith.constant 0 : index
    %23 = vector.load %arg7[%c0_26, %c0_27, %c0_28] : memref<1x1x128xf32, #tpu.memory_space<vmem>>, vector<1x1x128xf32>
    %24 = vector.shape_cast %23 : vector<1x1x128xf32> to vector<1x128xf32>
    %25 = vector.shape_cast %22 : vector<1x128xf32> to vector<1x1x128xf32>
    tpu.vector_store %arg7[%c0_26, %c0_27, %c0_28], %25 {strides = array<i32>} : memref<1x1x128xf32, #tpu.memory_space<vmem>>, vector<1x1x128xf32>,
    return
  }
  func.func @transform_0(%arg0: i32) -> (i32, i32, i32, i32) {
    %c0_i32 = arith.constant 0 : i32
    %c0_i32_0 = arith.constant 0 : i32
    %c0_i32_1 = arith.constant 0 : i32
    %c0_i32_2 = arith.constant 0 : i32
    return %arg0, %c0_i32, %c0_i32_0, %c0_i32_1 : i32, i32, i32, i32
  }
  func.func @transform_1(%arg0: i32) -> (i32, i32) {
    %c0_i32 = arith.constant 0 : i32
    %c0_i32_0 = arith.constant 0 : i32
    %c0_i32_1 = arith.constant 0 : i32
    return %c0_i32, %c0_i32_0 : i32, i32
  }
  func.func @transform_2(%arg0: i32) -> (i32, i32) {
    %c0_i32 = arith.constant 0 : i32
    %c0_i32_0 = arith.constant 0 : i32
    %c0_i32_1 = arith.constant 0 : i32
    return %c0_i32, %c0_i32_0 : i32, i32
  }
  func.func @transform_3(%arg0: i32) -> (i32, i32) {
    %c0_i32 = arith.constant 0 : i32
    %c0_i32_0 = arith.constant 0 : i32
    %c0_i32_1 = arith.constant 0 : i32
    return %c0_i32, %c0_i32_0 : i32, i32
  }
  func.func @transform_4(%arg0: i32) -> (i32, i32) {
    %c0_i32 = arith.constant 0 : i32
    %c0_i32_0 = arith.constant 0 : i32
    %c0_i32_1 = arith.constant 0 : i32
    return %c0_i32, %c0_i32_0 : i32, i32
  }
  func.func @transform_5(%arg0: i32) -> (i32, i32) {
    %c0_i32 = arith.constant 0 : i32
    %c0_i32_0 = arith.constant 0 : i32
    %c0_i32_1 = arith.constant 0 : i32
    return %c0_i32, %c0_i32_0 : i32, i32
  }
  func.func @transform_6(%arg0: i32) -> (i32, i32, i32) {
    %c0_i32 = arith.constant 0 : i32
    %c0_i32_0 = arith.constant 0 : i32
    %c0_i32_1 = arith.constant 0 : i32
    return %arg0, %c0_i32, %c0_i32_0 : i32, i32, i32
  }
}

</mosaic_0001>

<llo_original>
// kernel: swag_cnn_forward.1
$region0: #{swag_cnn_forward.1}
  #allocation0 [shape = 'u32[]', space=smem, size = 0x4, offset = 0x4, fixed_abs, tag = 'smem constant byte address 0x4 - core index']
  #allocation1 [shape = 'u32[144,128]{1,0:T(1,128)}', space=vmem, size = 0x12000, scoped, tag = 'internal scratch']
  #allocation2 [shape = 'f32[16,128]{1,0:T(8,128)}', space=vmem, size = 0x2000, scoped, tag = 'scratch operand']
  %s0 = inlined_call_operand.vmem [shape: f32[2,1,18,128], index: 0, kind: input, shape index: {}]
  %s1 = inlined_call_operand.vmem [shape: f32[384,128], index: 1, kind: input, shape index: {}]
  %s2 = inlined_call_operand.vmem [shape: f32[1,128], index: 2, kind: input, shape index: {}]
  %s3 = inlined_call_operand.vmem [shape: f32[1,16], index: 3, kind: input, shape index: {}]
  %s4 = inlined_call_operand.vmem [shape: f32[128,128], index: 4, kind: input, shape index: {}]
  %s5 = inlined_call_operand.vmem [shape: f32[1,128], index: 5, kind: input, shape index: {}]
  %s6 = inlined_call_operand.hbm [shape: f32[2,1,128], index: 6, kind: output, shape index: {}]
  %s7 = sld [smem:[#allocation0]]
  $region57: #{swag_cnn_forward.1} parent=0
    _
  %s9 = ssub.s32 1, %s7
  %s10 = scalar_select 0, %s9, %s7
  $region1: #{swag_cnn_forward.1} parent=0
    #allocation3 [shape = 'u8[1024]{0}', space=vmem, size = 0x400, scoped, tag = 'output window, operand 0']
    #allocation4 [shape = 's32[2]{0}', space=sflag, size = 0x8, scoped, tag = 'scoped memory for swag_cnn_forward.1']
    %11 = vsyncpa [#allocation4], 0
    %s12 = scalar_lea.sflag [#allocation4], 1
    %13 = vsyncpa %s12, 0
    loop: start=0, step=1, limit=4
    $region2: #{swag_cnn_forward.1} parent=1 // loop_pre_header
      _
    $region3: #{swag_cnn_forward.1} parent=1 // loop_header
      %s15 = sphi 0, %s19
      %p16 = scmp.ge.s32.totalorder %s15, 4
      %s25 = sphi 0, %s27
      %s28 = sphi 0, %s25
      %s29 = sphi 0, %s28
      %s45 = sphi 0, %s29
      %s49 = sphi 0, %s49
      %s51 = sphi 0, %s49
      %s52 = sphi 0, %s51
      %s66 = sphi 0, %s52
      %s70 = sphi 0, %s70
      %s72 = sphi 0, %s70
      %s73 = sphi 0, %s72
      %s87 = sphi 0, %s73
      %s91 = sphi 0, %s91
      %s93 = sphi 0, %s91
      %s94 = sphi 0, %s93
      %s108 = sphi 0, %s94
      %s112 = sphi 0, %s112
      %s114 = sphi 0, %s112
      %s115 = sphi 0, %s114
      %s129 = sphi 0, %s115
      %s133 = sphi 0, %s133
      %s135 = sphi 0, %s133
      %s136 = sphi 0, %s135
      %s150 = sphi 0, %s136
      %s156 = sphi 0, %s158
      %s159 = sphi 0, %s156
      %s160 = sphi 0, %s159
      %s176 = sphi 0, %s160
    $region4: #{swag_cnn_forward.1} parent=1 // loop_header_branch
      %18 = sbr.rel (%p16) target = $region8
    $region5: #{swag_cnn_forward.1} parent=1 // loop_body
      %s20 = ssub.s32 %s15, 1
      %s21 = ssub.s32 %s15, 2
      %s22 = sadd.s32 %s15, 1
      %s23 = ssub.s32 %s15, %s22
      %p24 = scmp.eq.s32.totalorder %s23, 0
      %s26 = sadd.s32 %s25, 1
      %s27 = scalar_select %p24, %s25, %s26
      %p30 = pneg %p24
      %p31 = scmp.eq.s32.totalorder %s15, 1
      %p32 = por %p30, %p31
      %p33 = scmp.ne.s32.totalorder %s25, %s28
      %p34 = scmp.eq.s32.totalorder %s15, 0
      %p35 = por %p33, %p34
      %p36 = scmp.ne.s32.totalorder %s25, %s28
      %p37 = scmp.eq.s32.totalorder %s20, 1
      %p38 = por %p36, %p37
      %p39 = scmp.ne.s32.totalorder %s28, %s29
      %p40 = scmp.eq.s32.totalorder %s20, 0
      %p41 = por %p39, %p40
      %p42 = scmp.ne.s32.totalorder %s28, %s29
      %p43 = scmp.eq.s32.totalorder %s21, 1
      %p44 = por %p42, %p43
      %p46 = scmp.ne.s32.totalorder %s29, %s45
      %p47 = scmp.eq.s32.totalorder %s21, 0
      %p48 = por %p46, %p47
      %s50 = sadd.s32 %s49, 1
      %p53 = scmp.eq.s32.totalorder %s15, 1
      %p54 = scmp.ne.s32.totalorder %s49, %s51
      %p55 = scmp.eq.s32.totalorder %s15, 0
      %p56 = por %p54, %p55
      %p57 = scmp.ne.s32.totalorder %s49, %s51
      %p58 = scmp.eq.s32.totalorder %s20, 1
      %p59 = por %p57, %p58
      %p60 = scmp.ne.s32.totalorder %s51, %s52
      %p61 = scmp.eq.s32.totalorder %s20, 0
      %p62 = por %p60, %p61
      %p63 = scmp.ne.s32.totalorder %s51, %s52
      %p64 = scmp.eq.s32.totalorder %s21, 1
      %p65 = por %p63, %p64
      %p67 = scmp.ne.s32.totalorder %s52, %s66
      %p68 = scmp.eq.s32.totalorder %s21, 0
      %p69 = por %p67, %p68
      %s71 = sadd.s32 %s70, 1
      %p74 = scmp.eq.s32.totalorder %s15, 1
      %p75 = scmp.ne.s32.totalorder %s70, %s72
      %p76 = scmp.eq.s32.totalorder %s15, 0
      %p77 = por %p75, %p76
      %p78 = scmp.ne.s32.totalorder %s70, %s72
      %p79 = scmp.eq.s32.totalorder %s20, 1
      %p80 = por %p78, %p79
      %p81 = scmp.ne.s32.totalorder %s72, %s73
      %p82 = scmp.eq.s32.totalorder %s20, 0
      %p83 = por %p81, %p82
      %p84 = scmp.ne.s32.totalorder %s72, %s73
      %p85 = scmp.eq.s32.totalorder %s21, 1
      %p86 = por %p84, %p85
      %p88 = scmp.ne.s32.totalorder %s73, %s87
      %p89 = scmp.eq.s32.totalorder %s21, 0
      %p90 = por %p88, %p89
      %s92 = sadd.s32 %s91, 1
      %p95 = scmp.eq.s32.totalorder %s15, 1
      %p96 = scmp.ne.s32.totalorder %s91, %s93
      %p97 = scmp.eq.s32.totalorder %s15, 0
      %p98 = por %p96, %p97
      %p99 = scmp.ne.s32.totalorder %s91, %s93
      %p100 = scmp.eq.s32.totalorder %s20, 1
      %p101 = por %p99, %p100
      %p102 = scmp.ne.s32.totalorder %s93, %s94
      %p103 = scmp.eq.s32.totalorder %s20, 0
      %p104 = por %p102, %p103
      %p105 = scmp.ne.s32.totalorder %s93, %s94
      %p106 = scmp.eq.s32.totalorder %s21, 1
      %p107 = por %p105, %p106
      %p109 = scmp.ne.s32.totalorder %s94, %s108
      %p110 = scmp.eq.s32.totalorder %s21, 0
      %p111 = por %p109, %p110
      %s113 = sadd.s32 %s112, 1
      %p116 = scmp.eq.s32.totalorder %s15, 1
      %p117 = scmp.ne.s32.totalorder %s112, %s114
      %p118 = scmp.eq.s32.totalorder %s15, 0
      %p119 = por %p117, %p118
      %p120 = scmp.ne.s32.totalorder %s112, %s114
      %p121 = scmp.eq.s32.totalorder %s20, 1
      %p122 = por %p120, %p121
      %p123 = scmp.ne.s32.totalorder %s114, %s115
      %p124 = scmp.eq.s32.totalorder %s20, 0
      %p125 = por %p123, %p124
      %p126 = scmp.ne.s32.totalorder %s114, %s115
      %p127 = scmp.eq.s32.totalorder %s21, 1
      %p128 = por %p126, %p127
      %p130 = scmp.ne.s32.totalorder %s115, %s129
      %p131 = scmp.eq.s32.totalorder %s21, 0
      %p132 = por %p130, %p131
      %s134 = sadd.s32 %s133, 1
      %p137 = scmp.eq.s32.totalorder %s15, 1
      %p138 = scmp.ne.s32.totalorder %s133, %s135
      %p139 = scmp.eq.s32.totalorder %s15, 0
      %p140 = por %p138, %p139
      %p141 = scmp.ne.s32.totalorder %s133, %s135
      %p142 = scmp.eq.s32.totalorder %s20, 1
      %p143 = por %p141, %p142
      %p144 = scmp.ne.s32.totalorder %s135, %s136
      %p145 = scmp.eq.s32.totalorder %s20, 0
      %p146 = por %p144, %p145
      %p147 = scmp.ne.s32.totalorder %s135, %s136
      %p148 = scmp.eq.s32.totalorder %s21, 1
      %p149 = por %p147, %p148
      %p151 = scmp.ne.s32.totalorder %s136, %s150
      %p152 = scmp.eq.s32.totalorder %s21, 0
      %p153 = por %p151, %p152
      %s154 = ssub.s32 %s15, %s22
      %p155 = scmp.eq.s32.totalorder %s154, 0
      %s157 = sadd.s32 %s156, 1
      %s158 = scalar_select %p155, %s156, %s157
      %p161 = pneg %p155
      %p162 = scmp.eq.s32.totalorder %s15, 1
      %p163 = por %p161, %p162
      %p164 = scmp.ne.s32.totalorder %s156, %s159
      %p165 = scmp.eq.s32.totalorder %s15, 0
      %p166 = por %p164, %p165
      %p167 = scmp.ne.s32.totalorder %s156, %s159
      %p168 = scmp.eq.s32.totalorder %s20, 1
      %p169 = por %p167, %p168
      %p170 = scmp.ne.s32.totalorder %s159, %s160
      %p171 = scmp.eq.s32.totalorder %s20, 0
      %p172 = por %p170, %p171
      %p173 = scmp.ne.s32.totalorder %s159, %s160
      %p174 = scmp.eq.s32.totalorder %s21, 1
      %p175 = por %p173, %p174
      %p177 = scmp.ne.s32.totalorder %s160, %s176
      %p178 = scmp.eq.s32.totalorder %s21, 0
      %p179 = por %p177, %p178
      %p180 = scmp.le.s32.totalorder 1, %s15
      %p181 = scmp.lt.s32.totalorder %s15, 3
      %p182 = pnand %p180, %p181
      %p183 = pneg %p182
      // Predicated region
      $region9: #{swag_cnn_forward.1} parent=5 // pred_check
        _
      $region10: #{swag_cnn_forward.1} parent=5 // pred_check_branch
        %185 = sbr.rel (%p182) target = $region12
      $region11: #{swag_cnn_forward.1} parent=5 // pred_region
        %s186 = ssub.s32 %s15, 1
        // Predicated region
        $region13: #{swag_cnn_forward.1} parent=11 // pred_check
          %p187 = pneg %p62
        $region14: #{swag_cnn_forward.1} parent=11 // pred_check_branch
          %189 = sbr.rel (%p187) target = $region16
        $region15: #{swag_cnn_forward.1} parent=11 // pred_region
          _
        $region16: #{swag_cnn_forward.1} parent=11 // pred_fallthru
          _
        // Predicated region
        $region17: #{swag_cnn_forward.1} parent=11 // pred_check
          %p190 = pneg %p83
        $region18: #{swag_cnn_forward.1} parent=11 // pred_check_branch
          %192 = sbr.rel (%p190) target = $region20
        $region19: #{swag_cnn_forward.1} parent=11 // pred_region
          _
        $region20: #{swag_cnn_forward.1} parent=11 // pred_fallthru
          _
        // Predicated region
        $region21: #{swag_cnn_forward.1} parent=11 // pred_check
          %p193 = pneg %p104
        $region22: #{swag_cnn_forward.1} parent=11 // pred_check_branch
          %195 = sbr.rel (%p193) target = $region24
        $region23: #{swag_cnn_forward.1} parent=11 // pred_region
          _
        $region24: #{swag_cnn_forward.1} parent=11 // pred_fallthru
          _
        // Predicated region
        $region25: #{swag_cnn_forward.1} parent=11 // pred_check
          %p196 = pneg %p125
        $region26: #{swag_cnn_forward.1} parent=11 // pred_check_branch
          %198 = sbr.rel (%p196) target = $region28
        $region27: #{swag_cnn_forward.1} parent=11 // pred_region
          _
        $region28: #{swag_cnn_forward.1} parent=11 // pred_fallthru
          _
        // Predicated region
        $region29: #{swag_cnn_forward.1} parent=11 // pred_check
          %p199 = pneg %p146
        $region30: #{swag_cnn_forward.1} parent=11 // pred_check_branch
          %201 = sbr.rel (%p199) target = $region32
        $region31: #{swag_cnn_forward.1} parent=11 // pred_region
          _
        $region32: #{swag_cnn_forward.1} parent=11 // pred_fallthru
          _
      $region12: #{swag_cnn_forward.1} parent=5 // pred_fallthru
        _
      %p202 = scmp.lt.s32.totalorder %s15, 2
      // Predicated region
      $region33: #{swag_cnn_forward.1} parent=5 // pred_check
        %p203 = pneg %p202
      $region34: #{swag_cnn_forward.1} parent=5 // pred_check_branch
        %205 = sbr.rel (%p203) target = $region36
      $region35: #{swag_cnn_forward.1} parent=5 // pred_region
        // Predicated region
        $region37: #{swag_cnn_forward.1} parent=35 // pred_check
          %p206 = pneg %p35
        $region38: #{swag_cnn_forward.1} parent=35 // pred_check_branch
          %208 = sbr.rel (%p206) target = $region40
        $region39: #{swag_cnn_forward.1} parent=35 // pred_region
          %p209 = scmp.lt.s32.totalorder %s15, 1
          %s210 = scalar_select %p209, %s15, 1
          %s211 = smul.addr %s210, 3
          %s212 = smul.addr %s211, 8
          %s213 = scalar_lea.vmem %s0, %s212
        $region40: #{swag_cnn_forward.1} parent=35 // pred_fallthru
          _
      $region36: #{swag_cnn_forward.1} parent=5 // pred_fallthru
        _
      %p214 = scmp.le.s32.totalorder 1, %s15
      %p215 = scmp.lt.s32.totalorder %s15, 3
      %p216 = pnand %p214, %p215
      %p217 = pneg %p216
      // Predicated region
      $region41: #{swag_cnn_forward.1} parent=5 // pred_check
        _
      $region42: #{swag_cnn_forward.1} parent=5 // pred_check_branch
        %219 = sbr.rel (%p216) target = $region44
      $region43: #{swag_cnn_forward.1} parent=5 // pred_region
        %s220 = ssub.s32 %s15, 1
        %p221 = scmp.lt.s32.totalorder %s20, 1
        %s222 = scalar_select %p221, %s20, 1
        %s223 = smul.addr %s222, 3
        %s224 = smul.addr %s223, 8
        %s225 = scalar_lea.vmem %s0, %s224
        %p226 = pneg %p41
        %p227 = pneg %p38
        %p228 = pneg %p62
        %p229 = pneg %p59
        %p230 = pneg %p83
        %p231 = pneg %p80
        %p232 = pneg %p104
        %p233 = pneg %p101
        %p234 = pneg %p125
        %p235 = pneg %p122
        %p236 = pneg %p146
        %p237 = pneg %p143
        %p238 = pneg %p172
        %p239 = pneg %p169
        %s240 = sand.u32 %s159, 1
        %s241 = scalar_lea.sflag [#allocation4], %s240
        %s242 = sand.u32 %s159, 1
        %s243 = scalar_lea.vmem [#allocation3], %s242
        %p244 = scmp.lt.s32.totalorder %s20, 1
        %s245 = scalar_select %p244, %s20, 1
        %s246 = smul.addr %s245, 3
        %s247 = smul.addr %s246, 8
        %s248 = scalar_lea.vmem %s0, %s247
        %v249 = vld [vmem:[%s248] sm:$0xff]
        %v250 = vld [vmem:[%s248 + $0x8] sm:$0xff]
        %v251 = vld [vmem:[%s248 + $0x1] sm:$0xff]
        %v252 = vld [vmem:[%s248 + $0x9] sm:$0xff]
        %v253 = vld [vmem:[%s248 + $0x2] sm:$0xff]
        %v254 = vld [vmem:[%s248 + $0xa] sm:$0xff]
        %v255 = vld [vmem:[%s1] sm:$0xff]
        %v256 = vld [vmem:[%s1 + $0x8] sm:$0xff]
        %v257 = vld [vmem:[%s1 + $0x10] sm:$0xff]
        %v258 = vld [vmem:[%s1 + $0x18] sm:$0xff]
        %v259 = vld [vmem:[%s1 + $0x20] sm:$0xff]
        %v260 = vld [vmem:[%s1 + $0x28] sm:$0xff]
        %v261 = vld [vmem:[%s1 + $0x30] sm:$0xff]
        %v262 = vld [vmem:[%s1 + $0x38] sm:$0xff]
        %v263 = vld [vmem:[%s1 + $0x40] sm:$0xff]
        %v264 = vld [vmem:[%s1 + $0x48] sm:$0xff]
        %v265 = vld [vmem:[%s1 + $0x50] sm:$0xff]
        %v266 = vld [vmem:[%s1 + $0x58] sm:$0xff]
        %v267 = vld [vmem:[%s1 + $0x60] sm:$0xff]
        %v268 = vld [vmem:[%s1 + $0x68] sm:$0xff]
        %v269 = vld [vmem:[%s1 + $0x70] sm:$0xff]
        %v270 = vld [vmem:[%s1 + $0x78] sm:$0xff]
        %v271 = vld [vmem:[%s1 + $0x80] sm:$0xff]
        %v272 = vld [vmem:[%s1 + $0x88] sm:$0xff]
        %v273 = vld [vmem:[%s1 + $0x90] sm:$0xff]
        %v274 = vld [vmem:[%s1 + $0x98] sm:$0xff]
        %v275 = vld [vmem:[%s1 + $0xa0] sm:$0xff]
        %v276 = vld [vmem:[%s1 + $0xa8] sm:$0xff]
        %v277 = vld [vmem:[%s1 + $0xb0] sm:$0xff]
        %v278 = vld [vmem:[%s1 + $0xb8] sm:$0xff]
        %v279 = vld [vmem:[%s1 + $0xc0] sm:$0xff]
        %v280 = vld [vmem:[%s1 + $0xc8] sm:$0xff]
        %v281 = vld [vmem:[%s1 + $0xd0] sm:$0xff]
        %v282 = vld [vmem:[%s1 + $0xd8] sm:$0xff]
        %v283 = vld [vmem:[%s1 + $0xe0] sm:$0xff]
        %v284 = vld [vmem:[%s1 + $0xe8] sm:$0xff]
        %v285 = vld [vmem:[%s1 + $0xf0] sm:$0xff]
        %v286 = vld [vmem:[%s1 + $0xf8] sm:$0xff]
        %v287 = vld [vmem:[%s1 + $0x100] sm:$0xff]
        %v288 = vld [vmem:[%s1 + $0x108] sm:$0xff]
        %v289 = vld [vmem:[%s1 + $0x110] sm:$0xff]
        %v290 = vld [vmem:[%s1 + $0x118] sm:$0xff]
        %v291 = vld [vmem:[%s1 + $0x120] sm:$0xff]
        %v292 = vld [vmem:[%s1 + $0x128] sm:$0xff]
        %v293 = vld [vmem:[%s1 + $0x130] sm:$0xff]
        %v294 = vld [vmem:[%s1 + $0x138] sm:$0xff]
        %v295 = vld [vmem:[%s1 + $0x140] sm:$0xff]
        %v296 = vld [vmem:[%s1 + $0x148] sm:$0xff]
        %v297 = vld [vmem:[%s1 + $0x150] sm:$0xff]
        %v298 = vld [vmem:[%s1 + $0x158] sm:$0xff]
        %v299 = vld [vmem:[%s1 + $0x160] sm:$0xff]
        %v300 = vld [vmem:[%s1 + $0x168] sm:$0xff]
        %v301 = vld [vmem:[%s1 + $0x170] sm:$0xff]
        %v302 = vld [vmem:[%s1 + $0x178] sm:$0xff]
        %303 = vmatprep.subr.mxu0 0.0
        %304 = vmatpush1.msra.mxu0 %v270
        %305 = vmatprep.subr.mxu0 0.0
        %306 = vmatpush1.msra.mxu0 %v269
        %307 = vmatprep.subr.mxu0 0.0
        %308 = vmatpush1.msra.mxu0 %v268
        %309 = vmatprep.subr.mxu0 0.0
        %310 = vmatpush1.msra.mxu0 %v267
        %311 = vmatprep.subr.mxu0 0.0
        %312 = vmatpush1.msra.mxu0 %v266
        %313 = vmatprep.subr.mxu0 0.0
        %314 = vmatpush1.msra.mxu0 %v265
        %315 = vmatprep.subr.mxu0 0.0
        %316 = vmatpush1.msra.mxu0 %v264
        %317 = vmatprep.subr.mxu0 0.0
        %318 = vmatpush1.msra.mxu0 %v263
        %319 = vmatprep.subr.mxu0 0.0
        %320 = vmatpush1.msra.mxu0 %v262
        %321 = vmatprep.subr.mxu0 0.0
        %322 = vmatpush1.msra.mxu0 %v261
        %323 = vmatprep.subr.mxu0 0.0
        %324 = vmatpush1.msra.mxu0 %v260
        %325 = vmatprep.subr.mxu0 0.0
        %326 = vmatpush1.msra.mxu0 %v259
        %327 = vmatprep.subr.mxu0 0.0
        %328 = vmatpush1.msra.mxu0 %v258
        %329 = vmatprep.subr.mxu0 0.0
        %330 = vmatpush1.msra.mxu0 %v257
        %331 = vmatprep.subr.mxu0 0.0
        %332 = vmatpush1.msra.mxu0 %v256
        %333 = vmatprep.subr.mxu0 0.0
        %334 = vmatpush1.msra.mxu0 %v255
        %335 = vmatprep.subr.mxu0 0.0
        %336 = vmatpush2.msra.mxu0 %v286
        %337 = vmatprep.subr.mxu0 0.0
        %338 = vmatpush2.msra.mxu0 %v285
        %339 = vmatprep.subr.mxu0 0.0
        %340 = vmatpush2.msra.mxu0 %v284
        %341 = vmatprep.subr.mxu0 0.0
        %342 = vmatpush2.msra.mxu0 %v283
        %343 = vmatprep.subr.mxu0 0.0
        %344 = vmatpush2.msra.mxu0 %v282
        %345 = vmatprep.subr.mxu0 0.0
        %346 = vmatpush2.msra.mxu0 %v281
        %347 = vmatprep.subr.mxu0 0.0
        %348 = vmatpush2.msra.mxu0 %v280
        %349 = vmatprep.subr.mxu0 0.0
        %350 = vmatpush2.msra.mxu0 %v279
        %351 = vmatprep.subr.mxu0 0.0
        %352 = vmatpush2.msra.mxu0 %v278
        %353 = vmatprep.subr.mxu0 0.0
        %354 = vmatpush2.msra.mxu0 %v277
        %355 = vmatprep.subr.mxu0 0.0
        %356 = vmatpush2.msra.mxu0 %v276
        %357 = vmatprep.subr.mxu0 0.0
        %358 = vmatpush2.msra.mxu0 %v275
        %359 = vmatprep.subr.mxu0 0.0
        %360 = vmatpush2.msra.mxu0 %v274
        %361 = vmatprep.subr.mxu0 0.0
        %362 = vmatpush2.msra.mxu0 %v273
        %363 = vmatprep.subr.mxu0 0.0
        %364 = vmatpush2.msra.mxu0 %v272
        %365 = vmatprep.subr.mxu0 0.0
        %366 = vmatpush2.msra.mxu0 %v271
        %367 = vmatprep.mubr.f32.mxu0 %v251
        %368 = vmatmul.mubr.f32.gmra.mxu0 %v249
        %v369 = vpop.f32.mrf.mxu0
        %v370 = vadd.f32 0.0, %v369
        %v371 = vpop.f32.mrf.mxu0
        %372 = vmatprep.mubr.f32.mxu0 %v252
        %373 = vmatmul.mubr.f32.gmra.mxu0 %v250
        %v374 = vpop.f32.mrf.mxu0
        %v375 = vadd.f32 0.0, %v374
        %v376 = vpop.f32.mrf.mxu0
        %377 = vdwg.mxu0
        %378 = vmatprep.subr.mxu0 0.0
        %379 = vmatpush1.msra.mxu0 %v302
        %380 = vmatprep.subr.mxu0 0.0
        %381 = vmatpush1.msra.mxu0 %v301
        %382 = vmatprep.subr.mxu0 0.0
        %383 = vmatpush1.msra.mxu0 %v300
        %384 = vmatprep.subr.mxu0 0.0
        %385 = vmatpush1.msra.mxu0 %v299
        %386 = vmatprep.subr.mxu0 0.0
        %387 = vmatpush1.msra.mxu0 %v298
        %388 = vmatprep.subr.mxu0 0.0
        %389 = vmatpush1.msra.mxu0 %v297
        %390 = vmatprep.subr.mxu0 0.0
        %391 = vmatpush1.msra.mxu0 %v296
        %392 = vmatprep.subr.mxu0 0.0
        %393 = vmatpush1.msra.mxu0 %v295
        %394 = vmatprep.subr.mxu0 0.0
        %395 = vmatpush1.msra.mxu0 %v294
        %396 = vmatprep.subr.mxu0 0.0
        %397 = vmatpush1.msra.mxu0 %v293
        %398 = vmatprep.subr.mxu0 0.0
        %399 = vmatpush1.msra.mxu0 %v292
        %400 = vmatprep.subr.mxu0 0.0
        %401 = vmatpush1.msra.mxu0 %v291
        %402 = vmatprep.subr.mxu0 0.0
        %403 = vmatpush1.msra.mxu0 %v290
        %404 = vmatprep.subr.mxu0 0.0
        %405 = vmatpush1.msra.mxu0 %v289
        %406 = vmatprep.subr.mxu0 0.0
        %407 = vmatpush1.msra.mxu0 %v288
        %408 = vmatprep.subr.mxu0 0.0
        %409 = vmatpush1.msra.mxu0 %v287
        %410 = vmatprep.subr.mxu0 0.0
        %411 = vmatpush2.msra.mxu0 0.0
        %412 = vmatprep.subr.mxu0 0.0
        %413 = vmatpush2.msra.mxu0 0.0
        %414 = vmatprep.subr.mxu0 0.0
        %415 = vmatpush2.msra.mxu0 0.0
        %416 = vmatprep.subr.mxu0 0.0
        %417 = vmatpush2.msra.mxu0 0.0
        %418 = vmatprep.subr.mxu0 0.0
        %419 = vmatpush2.msra.mxu0 0.0
        %420 = vmatprep.subr.mxu0 0.0
        %421 = vmatpush2.msra.mxu0 0.0
        %422 = vmatprep.subr.mxu0 0.0
        %423 = vmatpush2.msra.mxu0 0.0
        %424 = vmatprep.subr.mxu0 0.0
        %425 = vmatpush2.msra.mxu0 0.0
        %426 = vmatprep.subr.mxu0 0.0
        %427 = vmatpush2.msra.mxu0 0.0
        %428 = vmatprep.subr.mxu0 0.0
        %429 = vmatpush2.msra.mxu0 0.0
        %430 = vmatprep.subr.mxu0 0.0
        %431 = vmatpush2.msra.mxu0 0.0
        %432 = vmatprep.subr.mxu0 0.0
        %433 = vmatpush2.msra.mxu0 0.0
        %434 = vmatprep.subr.mxu0 0.0
        %435 = vmatpush2.msra.mxu0 0.0
        %436 = vmatprep.subr.mxu0 0.0
        %437 = vmatpush2.msra.mxu0 0.0
        %438 = vmatprep.subr.mxu0 0.0
        %439 = vmatpush2.msra.mxu0 0.0
        %440 = vmatprep.subr.mxu0 0.0
        %441 = vmatpush2.msra.mxu0 0.0
        %442 = vmatprep.mubr.f32.mxu0 0.0
        %443 = vmatmul.mubr.f32.gmra.mxu0 %v253
        %v444 = vpop.f32.mrf.mxu0
        %v445 = vadd.f32 %v370, %v444
        %v446 = vpop.f32.mrf.mxu0
        %447 = vmatprep.mubr.f32.mxu0 0.0
        %448 = vmatmul.mubr.f32.gmra.mxu0 %v254
        %v449 = vpop.f32.mrf.mxu0
        %v450 = vadd.f32 %v375, %v449
        %v451 = vpop.f32.mrf.mxu0
        %452 = vdwg.mxu0
        %453 = vst [vmem:[#allocation2] sm:$0xff] %v445
        %454 = vst [vmem:[#allocation2 + $0x8] sm:$0xff] %v450
        %v455 = vld [vmem:[#allocation2] sm:$0xff]
        %v456 = vld [vmem:[#allocation2 + $0x8] sm:$0xff]
        %v457 = vld [vmem:[%s2] sm:$0x1]
        %v459 = vlaneseq
        %v460 = vshrl.u32 %v459, 7
        %v461 = vsub.s32 0, %v460
        %v462 = vrot.slane %v457, %v461
        %v464 = vadd.f32 %v455, %v462
        %v465 = vadd.f32 %v456, %v462
        %v466 = vmax.f32 %v464, 0.0
        %v467 = vmax.f32 %v465, 0.0
        %v468 = vld [vmem:[%s3] sm:$0x1]
        %vm469 = vcmask 130048
        %v471 = vsel %vm469, %v468, 0
        %473 = vmatprep.subr.mxu0 0.0
        %474 = vmatpush1.msra.mxu0 0.0
        %475 = vmatprep.subr.mxu0 0.0
        %476 = vmatpush1.msra.mxu0 0.0
        %477 = vmatprep.subr.mxu0 0.0
        %478 = vmatpush1.msra.mxu0 0.0
        %479 = vmatprep.subr.mxu0 0.0
        %480 = vmatpush1.msra.mxu0 0.0
        %481 = vmatprep.subr.mxu0 0.0
        %482 = vmatpush1.msra.mxu0 0.0
        %483 = vmatprep.subr.mxu0 0.0
        %484 = vmatpush1.msra.mxu0 0.0
        %485 = vmatprep.subr.mxu0 0.0
        %486 = vmatpush1.msra.mxu0 0.0
        %487 = vmatprep.subr.mxu0 0.0
        %488 = vmatpush1.msra.mxu0 0.0
        %489 = vmatprep.subr.mxu0 0.0
        %490 = vmatpush1.msra.mxu0 0.0
        %491 = vmatprep.subr.mxu0 0.0
        %492 = vmatpush1.msra.mxu0 0.0
        %493 = vmatprep.subr.mxu0 0.0
        %494 = vmatpush1.msra.mxu0 0.0
        %495 = vmatprep.subr.mxu0 0.0
        %496 = vmatpush1.msra.mxu0 0.0
        %497 = vmatprep.subr.mxu0 0.0
        %498 = vmatpush1.msra.mxu0 0.0
        %499 = vmatprep.subr.mxu0 0.0
        %500 = vmatpush1.msra.mxu0 0.0
        %501 = vmatprep.subr.mxu0 0.0
        %502 = vmatpush1.msra.mxu0 %v467
        %503 = vmatprep.subr.mxu0 0.0
        %504 = vmatpush1.msra.mxu0 %v466
        %505 = vmatprep.subr.mxu0 0.0
        %506 = vmatpush2.msra.mxu0 0.0
        %507 = vmatprep.subr.mxu0 0.0
        %508 = vmatpush2.msra.mxu0 0.0
        %509 = vmatprep.subr.mxu0 0.0
        %510 = vmatpush2.msra.mxu0 0.0
        %511 = vmatprep.subr.mxu0 0.0
        %512 = vmatpush2.msra.mxu0 0.0
        %513 = vmatprep.subr.mxu0 0.0
        %514 = vmatpush2.msra.mxu0 0.0
        %515 = vmatprep.subr.mxu0 0.0
        %516 = vmatpush2.msra.mxu0 0.0
        %517 = vmatprep.subr.mxu0 0.0
        %518 = vmatpush2.msra.mxu0 0.0
        %519 = vmatprep.subr.mxu0 0.0
        %520 = vmatpush2.msra.mxu0 0.0
        %521 = vmatprep.subr.mxu0 0.0
        %522 = vmatpush2.msra.mxu0 0.0
        %523 = vmatprep.subr.mxu0 0.0
        %524 = vmatpush2.msra.mxu0 0.0
        %525 = vmatprep.subr.mxu0 0.0
        %526 = vmatpush2.msra.mxu0 0.0
        %527 = vmatprep.subr.mxu0 0.0
        %528 = vmatpush2.msra.mxu0 0.0
        %529 = vmatprep.subr.mxu0 0.0
        %530 = vmatpush2.msra.mxu0 0.0
        %531 = vmatprep.subr.mxu0 0.0
        %532 = vmatpush2.msra.mxu0 0.0
        %533 = vmatprep.subr.mxu0 0.0
        %534 = vmatpush2.msra.mxu0 0.0
        %535 = vmatprep.subr.mxu0 0.0
        %536 = vmatpush2.msra.mxu0 0.0
        %537 = vmatprep.mubr.f32.mxu0 0.0
        %538 = vmatmul.mubr.f32.gmra.mxu0 %v471
        %v539 = vpop.f32.mrf.mxu0
        %v540 = vadd.f32 0.0, %v539
        %v541 = vpop.f32.mrf.mxu0
        %542 = vdwg.mxu0
        %v543 = vld [vmem:[%s4] sm:$0xff]
        %v544 = vld [vmem:[%s4 + $0x8] sm:$0xff]
        %v545 = vld [vmem:[%s4 + $0x10] sm:$0xff]
        %v546 = vld [vmem:[%s4 + $0x18] sm:$0xff]
        %v547 = vld [vmem:[%s4 + $0x20] sm:$0xff]
        %v548 = vld [vmem:[%s4 + $0x28] sm:$0xff]
        %v549 = vld [vmem:[%s4 + $0x30] sm:$0xff]
        %v550 = vld [vmem:[%s4 + $0x38] sm:$0xff]
        %v551 = vld [vmem:[%s4 + $0x40] sm:$0xff]
        %v552 = vld [vmem:[%s4 + $0x48] sm:$0xff]
        %v553 = vld [vmem:[%s4 + $0x50] sm:$0xff]
        %v554 = vld [vmem:[%s4 + $0x58] sm:$0xff]
        %v555 = vld [vmem:[%s4 + $0x60] sm:$0xff]
        %v556 = vld [vmem:[%s4 + $0x68] sm:$0xff]
        %v557 = vld [vmem:[%s4 + $0x70] sm:$0xff]
        %v558 = vld [vmem:[%s4 + $0x78] sm:$0xff]
        %v559 = vld [vmem:[%s5] sm:$0x1]
        %560 = vmatprep.subr.mxu0 0.0
        %561 = vmatpush1.msra.mxu0 %v558
        %562 = vmatprep.subr.mxu0 0.0
        %563 = vmatpush1.msra.mxu0 %v557
        %564 = vmatprep.subr.mxu0 0.0
        %565 = vmatpush1.msra.mxu0 %v556
        %566 = vmatprep.subr.mxu0 0.0
        %567 = vmatpush1.msra.mxu0 %v555
        %568 = vmatprep.subr.mxu0 0.0
        %569 = vmatpush1.msra.mxu0 %v554
        %570 = vmatprep.subr.mxu0 0.0
        %571 = vmatpush1.msra.mxu0 %v553
        %572 = vmatprep.subr.mxu0 0.0
        %573 = vmatpush1.msra.mxu0 %v552
        %574 = vmatprep.subr.mxu0 0.0
        %575 = vmatpush1.msra.mxu0 %v551
        %576 = vmatprep.subr.mxu0 0.0
        %577 = vmatpush1.msra.mxu0 %v550
        %578 = vmatprep.subr.mxu0 0.0
        %579 = vmatpush1.msra.mxu0 %v549
        %580 = vmatprep.subr.mxu0 0.0
        %581 = vmatpush1.msra.mxu0 %v548
        %582 = vmatprep.subr.mxu0 0.0
        %583 = vmatpush1.msra.mxu0 %v547
        %584 = vmatprep.subr.mxu0 0.0
        %585 = vmatpush1.msra.mxu0 %v546
        %586 = vmatprep.subr.mxu0 0.0
        %587 = vmatpush1.msra.mxu0 %v545
        %588 = vmatprep.subr.mxu0 0.0
        %589 = vmatpush1.msra.mxu0 %v544
        %590 = vmatprep.subr.mxu0 0.0
        %591 = vmatpush1.msra.mxu0 %v543
        %592 = vmatprep.subr.mxu0 0.0
        %593 = vmatpush2.msra.mxu0 0.0
        %594 = vmatprep.subr.mxu0 0.0
        %595 = vmatpush2.msra.mxu0 0.0
        %596 = vmatprep.subr.mxu0 0.0
        %597 = vmatpush2.msra.mxu0 0.0
        %598 = vmatprep.subr.mxu0 0.0
        %599 = vmatpush2.msra.mxu0 0.0
        %600 = vmatprep.subr.mxu0 0.0
        %601 = vmatpush2.msra.mxu0 0.0
        %602 = vmatprep.subr.mxu0 0.0
        %603 = vmatpush2.msra.mxu0 0.0
        %604 = vmatprep.subr.mxu0 0.0
        %605 = vmatpush2.msra.mxu0 0.0
        %606 = vmatprep.subr.mxu0 0.0
        %607 = vmatpush2.msra.mxu0 0.0
        %608 = vmatprep.subr.mxu0 0.0
        %609 = vmatpush2.msra.mxu0 0.0
        %610 = vmatprep.subr.mxu0 0.0
        %611 = vmatpush2.msra.mxu0 0.0
        %612 = vmatprep.subr.mxu0 0.0
        %613 = vmatpush2.msra.mxu0 0.0
        %614 = vmatprep.subr.mxu0 0.0
        %615 = vmatpush2.msra.mxu0 0.0
        %616 = vmatprep.subr.mxu0 0.0
        %617 = vmatpush2.msra.mxu0 0.0
        %618 = vmatprep.subr.mxu0 0.0
        %619 = vmatpush2.msra.mxu0 0.0
        %620 = vmatprep.subr.mxu0 0.0
        %621 = vmatpush2.msra.mxu0 0.0
        %622 = vmatprep.subr.mxu0 0.0
        %623 = vmatpush2.msra.mxu0 0.0
        %624 = vmatprep.mubr.f32.mxu0 0.0
        %625 = vmatmul.mubr.f32.gmra.mxu0 %v540
        %v626 = vpop.f32.mrf.mxu0
        %v627 = vadd.f32 %v559, %v626
        %v628 = vpop.f32.mrf.mxu0
        %629 = vdwg.mxu0
        %630 = vst [vmem:[%s243] sm:$0x1] %v627
        %s631 = sand.u32 %s159, 1
        %s632 = scalar_lea.sflag [#allocation4], %s631
        %s633 = sand.u32 %s159, 1
        %s634 = scalar_lea.vmem [#allocation3], %s633
        // Predicated region
        $region45: #{swag_cnn_forward.1} parent=43 // pred_check
          %p635 = pneg %p169
        $region46: #{swag_cnn_forward.1} parent=43 // pred_check_branch
          %637 = sbr.rel (%p635) target = $region48
        $region47: #{swag_cnn_forward.1} parent=43 // pred_region
          %s639 = ssub.s32 16, 16
          %640 = vsyncadd %s632, %s639
          %s641 = smul.addr %s20, 16
          %s642 = scalar_lea.hbm %s6, %s641
          %s644 = sshll.u32 %s634, 4
          %s645 = int_to_ptr.vmem [resolvable:$true] %s644
          %647 = dma.vmem_to_hbm [thread:$0]  %s645, 16, %s642, %s632
        $region48: #{swag_cnn_forward.1} parent=43 // pred_fallthru
          _
      $region44: #{swag_cnn_forward.1} parent=5 // pred_fallthru
        _
      %p648 = scmp.le.s32.totalorder 2, %s15
      // Predicated region
      $region49: #{swag_cnn_forward.1} parent=5 // pred_check
        %p649 = pneg %p648
      $region50: #{swag_cnn_forward.1} parent=5 // pred_check_branch
        %651 = sbr.rel (%p649) target = $region52
      $region51: #{swag_cnn_forward.1} parent=5 // pred_region
        %s652 = ssub.s32 %s15, 2
        // Predicated region
        $region53: #{swag_cnn_forward.1} parent=51 // pred_check
          %p653 = pneg %p175
        $region54: #{swag_cnn_forward.1} parent=51 // pred_check_branch
          %655 = sbr.rel (%p653) target = $region56
        $region55: #{swag_cnn_forward.1} parent=51 // pred_region
          %s656 = sand.u32 %s160, 1
          %s657 = scalar_lea.sflag [#allocation4], %s656
          %s658 = sand.u32 %s160, 1
          %s659 = scalar_lea.vmem [#allocation3], %s658
          %660 = dma.done %s657, 16
        $region56: #{swag_cnn_forward.1} parent=51 // pred_fallthru
          _
      $region52: #{swag_cnn_forward.1} parent=5 // pred_fallthru
        _
    $region6: #{swag_cnn_forward.1} parent=1 // loop_footer
      %s19 = sadd.s32 1, %s15
    $region7: #{swag_cnn_forward.1} parent=1 // loop_footer_branch
      %14 = sbr.rel target = $region3
    $region8: #{swag_cnn_forward.1} parent=1 // loop_exit
      _
    %661 = vsyncpa [#allocation4], 1
    %s662 = scalar_lea.sflag [#allocation4], 1
    %663 = vsyncpa %s662, 1

</llo_original>
